<compile_context>
chip_gen: v6e
topology: v6e:2x2x1
jax: 0.10.0
libtpu: 0.0.40
codegen_flags: <defaults>
</compile_context>

<pallas_src>
import functools
import math

import jax
import jax.numpy as jnp
from jax import lax
from jax.experimental import pallas as pl
from jax.experimental.pallas import tpu as pltpu


# ---------------------------------------------------------------------------
# Generation-dependent tiling / VMEM budgets (v5e/v6e have 128 MiB VMEM,
# v7x only 64 MiB but 2 TCs + 3.2 TB/s HBM).
# ---------------------------------------------------------------------------
def _gen_defaults():
    vmem_bytes = 64 * 1024 * 1024
    try:
        info = pltpu.get_tpu_info()
        vmem_bytes = int(getattr(info, "vmem_capacity_bytes", vmem_bytes))
    except Exception:
        pass
    if vmem_bytes >= 96 * 1024 * 1024:
        # v5e / v6e (128 MiB VMEM): bigger matmul/MLP tiles cut weight re-streams
        # and amortize per-grid-step overhead.
        # NOTE: on v5e specifically, attn tiles of 128 already saturate its 4x128
        # MXU; 256 is tuned for v6e's 2x256 MXU but stays well inside VMEM.
        return dict(vmem_limit=96 * 1024 * 1024,
                    mm_tm=512, mm_tn=256, mm_tk=1024,
                    attn_tq=256, attn_tkv=256,
                    mlp_tm=256, mlp_ti=1024,
                    mlp_budget=80 * 1024 * 1024)
    # v7x (64 MiB VMEM): smaller weight tiles, same attention tiles.
    return dict(vmem_limit=48 * 1024 * 1024,
                mm_tm=256, mm_tn=256, mm_tk=512,
                attn_tq=256, attn_tkv=256,
                mlp_tm=128, mlp_ti=256,
                mlp_budget=40 * 1024 * 1024)


_DEFAULTS = _gen_defaults()


# ---------------------------------------------------------------------------
# Config helpers (copied semantics from the PyTorch module)
# ---------------------------------------------------------------------------
def _find_multiple(n: int, k: int) -> int:
    if n % k == 0:
        return n
    return n + k - n % k


def _ffn_mult_to_intermediate_size(ffn_mult: float, n_embd: int) -> int:
    intermediate_size = int(2 * ffn_mult * n_embd / 3)
    return _find_multiple(intermediate_size, 256)


def _tile(dim: int, target: int, align: int) -> int:
    """Largest tile <= target that divides `dim` and is a multiple of `align`.

    Falls back to the full dim (always legal for BlockSpec) if no aligned divisor fits.
    """
    if dim <= target:
        return dim
    t = (target // align) * align
    while t >= align:
        if dim % t == 0:
            return t
        t -= align
    return dim


# ---------------------------------------------------------------------------
# Tiled matmul (bf16 inputs, f32 accumulation, K-reduction pipelined)
# ---------------------------------------------------------------------------
def _matmul_kernel(x_ref, w_ref, o_ref, acc_ref):
    @pl.when(pl.program_id(2) == 0)
    def _():
        acc_ref[...] = jnp.zeros_like(acc_ref)

    acc_ref[...] += jnp.dot(x_ref[...], w_ref[...],
                            preferred_element_type=jnp.float32)

    @pl.when(pl.program_id(2) == pl.num_programs(2) - 1)
    def _():
        o_ref[...] = acc_ref[...].astype(o_ref.dtype)


def pallas_matmul(x, w, out_dtype=jnp.bfloat16, tm=None, tn=None, tk=None):
    d = _DEFAULTS
    x = x.astype(jnp.bfloat16)
    w = w.astype(jnp.bfloat16)
    M, K = x.shape
    _, N = w.shape
    tm = _tile(M, d["mm_tm"] if tm is None else tm, 16)   # bf16 packs 16 rows/vreg
    tn = _tile(N, d["mm_tn"] if tn is None else tn, 128)
    tk = _tile(K, d["mm_tk"] if tk is None else tk, 128)
    return pl.pallas_call(
        _matmul_kernel,
        out_shape=jax.ShapeDtypeStruct((M, N), out_dtype),
        grid=(M // tm, N // tn, K // tk),
        in_specs=[pl.BlockSpec((tm, tk), lambda i, j, k: (i, k)),
                  pl.BlockSpec((tk, tn), lambda i, j, k: (k, j))],
        out_specs=pl.BlockSpec((tm, tn), lambda i, j, k: (i, j)),
        scratch_shapes=[pltpu.VMEM((tm, tn), jnp.float32)],
        compiler_params=pltpu.CompilerParams(
            dimension_semantics=("parallel", "parallel", "arbitrary"),
            vmem_limit_bytes=d["vmem_limit"]),
    )(x, w)


# ---------------------------------------------------------------------------
# Row-tiled RMSNorm (no-residual and fused-add variants).  Residual stream is
# carried in bf16 to halve the norm kernels' HBM traffic.
# ---------------------------------------------------------------------------
def _rmsnorm_kernel(x_ref, w_ref, o_ref, res_ref, *, eps):
    x = x_ref[...].astype(jnp.float32)
    res_ref[...] = x.astype(res_ref.dtype)
    var = jnp.mean(x * x, axis=-1, keepdims=True)
    o_ref[...] = ((x * lax.rsqrt(var + eps)) * w_ref[...]).astype(o_ref.dtype)


def _rmsnorm_add_kernel(x_ref, r_ref, w_ref, o_ref, res_ref, *, eps):
    # vLLM fused add + RMSNorm: x = x + residual; residual_out = x; out = rmsnorm(x)*w
    x = x_ref[...].astype(jnp.float32) + r_ref[...].astype(jnp.float32)
    res_ref[...] = x.astype(res_ref.dtype)
    var = jnp.mean(x * x, axis=-1, keepdims=True)
    o_ref[...] = ((x * lax.rsqrt(var + eps)) * w_ref[...]).astype(o_ref.dtype)


def pallas_rmsnorm(x, weight, eps, tm=256):
    T, H = x.shape
    tm = _tile(T, tm, 16)
    kern = functools.partial(_rmsnorm_kernel, eps=eps)
    return pl.pallas_call(
        kern,
        out_shape=(jax.ShapeDtypeStruct((T, H), jnp.bfloat16),
                   jax.ShapeDtypeStruct((T, H), jnp.bfloat16)),
        grid=(T // tm,),
        in_specs=[pl.BlockSpec((tm, H), lambda i: (i, 0)),
                  pl.BlockSpec((1, H), lambda i: (0, 0))],
        out_specs=(pl.BlockSpec((tm, H), lambda i: (i, 0)),
                   pl.BlockSpec((tm, H), lambda i: (i, 0))),
        compiler_params=pltpu.CompilerParams(
            dimension_semantics=("parallel",),
            vmem_limit_bytes=_DEFAULTS["vmem_limit"]),
    )(x, weight.reshape(1, H).astype(jnp.float32))


def pallas_rmsnorm_add(x, residual, weight, eps, tm=256):
    T, H = x.shape
    tm = _tile(T, tm, 16)
    kern = functools.partial(_rmsnorm_add_kernel, eps=eps)
    return pl.pallas_call(
        kern,
        out_shape=(jax.ShapeDtypeStruct((T, H), jnp.bfloat16),
                   jax.ShapeDtypeStruct((T, H), jnp.bfloat16)),
        grid=(T // tm,),
        in_specs=[pl.BlockSpec((tm, H), lambda i: (i, 0)),
                  pl.BlockSpec((tm, H), lambda i: (i, 0)),
                  pl.BlockSpec((1, H), lambda i: (0, 0))],
        out_specs=(pl.BlockSpec((tm, H), lambda i: (i, 0)),
                   pl.BlockSpec((tm, H), lambda i: (i, 0))),
        compiler_params=pltpu.CompilerParams(
            dimension_semantics=("parallel",),
            vmem_limit_bytes=_DEFAULTS["vmem_limit"]),
    )(x, residual.astype(jnp.bfloat16), weight.reshape(1, H).astype(jnp.float32))


# ---------------------------------------------------------------------------
# Fused RoPE over the Q+K head blocks of the qkv slab (one launch for Q and K,
# neox rotate-half via pltpu.roll on the lane axis).  The 1/sqrt(d) attention
# scale is folded into the Q rotation, so the attention kernel needs no scale.
# ---------------------------------------------------------------------------
def _rope_kernel(x_ref, cos_ref, sin_ref, o_ref, *, num_q_heads, scale):
    hb = pl.program_id(1)
    x = x_ref[...].astype(jnp.float32)
    rolled = pltpu.roll(x, shift=x.shape[-1] // 2, axis=1)   # [x2, x1]
    # cos_ref = [cos, cos], sin_ref = [-sin, sin]  ->  [x1*c - x2*s, x2*c + x1*s]
    rot = x * cos_ref[...] + rolled * sin_ref[...]
    s = jnp.where(hb < num_q_heads, jnp.float32(scale), jnp.float32(1.0))
    o_ref[...] = (rot * s).astype(o_ref.dtype)


def pallas_rope_qk(qkv, cos2, sin2, num_heads, num_kv_heads, head_dim, tq=None):
    # qkv: [T, (nH + 2*nKV)*d]  ->  roped_qk: [T, (nH + nKV)*d]  (Q pre-scaled)
    T = qkv.shape[0]
    tq = _tile(T, _DEFAULTS["attn_tq"] if tq is None else tq, 16)
    n_rope_heads = num_heads + num_kv_heads
    scale = 1.0 / math.sqrt(head_dim)
    kern = functools.partial(_rope_kernel, num_q_heads=num_heads, scale=scale)
    return pl.pallas_call(
        kern,
        out_shape=jax.ShapeDtypeStruct((T, n_rope_heads * head_dim), jnp.bfloat16),
        grid=(T // tq, n_rope_heads),
        in_specs=[pl.BlockSpec((tq, head_dim), lambda i, h: (i, h)),
                  pl.BlockSpec((tq, head_dim), lambda i, h: (i, 0)),
                  pl.BlockSpec((tq, head_dim), lambda i, h: (i, 0))],
        out_specs=pl.BlockSpec((tq, head_dim), lambda i, h: (i, h)),
        compiler_params=pltpu.CompilerParams(
            dimension_semantics=("parallel", "parallel"),
            vmem_limit_bytes=_DEFAULTS["vmem_limit"]),
    )(qkv, cos2, sin2)


# ---------------------------------------------------------------------------
# Flash-style causal attention.  The (q_block, kv_block) iteration space is
# flattened to ONLY the lower-triangular block pairs via scalar-prefetched
# (qi, kj, done) arrays driving the index_maps, so K/V blocks in the future of
# every q row are never DMA'd (the old pl.when guard skipped compute but not
# the DMA).  GQA handled by the kv-head column-block index_map on the roped
# Q/K slab (K) and the raw qkv slab (V).  Causal mask applied only on blocks
# that overlap the diagonal.
# ---------------------------------------------------------------------------
def _flash_attn_kernel(qi_ref, kj_ref, dn_ref, q_ref, k_ref, v_ref, o_ref,
                       m_ref, l_ref, acc_ref, *, tq, tkv):
    p = pl.program_id(1)
    qi = qi_ref[p]
    kj = kj_ref[p]

    @pl.when(kj == 0)
    def _():
        m_ref[...] = jnp.full_like(m_ref, -jnp.inf)
        l_ref[...] = jnp.zeros_like(l_ref)
        acc_ref[...] = jnp.zeros_like(acc_ref)

    def update(masked):
        # dot_general contracting on last dims: no explicit K transpose (no XLU pass)
        s = lax.dot_general(q_ref[...], k_ref[...], (((1,), (1,)), ((), ())),
                            preferred_element_type=jnp.float32)
        if masked:
            qpos = qi * tq + lax.broadcasted_iota(jnp.int32, (tq, tkv), 0)
            kpos = kj * tkv + lax.broadcasted_iota(jnp.int32, (tq, tkv), 1)
            s = jnp.where(qpos >= kpos, s, -1e30)
        m_prev = m_ref[...]
        m_new = jnp.maximum(m_prev, jnp.max(s, axis=-1, keepdims=True))
        alpha = jnp.exp(m_prev - m_new)              # f32 softmax statistics
        prob = jnp.exp(s - m_new)
        l_ref[...] = alpha * l_ref[...] + jnp.sum(prob, axis=-1, keepdims=True)
        acc_ref[...] = alpha * acc_ref[...] + jnp.dot(
            prob.astype(v_ref.dtype), v_ref[...], preferred_element_type=jnp.float32)
        m_ref[...] = m_new

    is_diag = (kj + 1) * tkv > qi * tq   # block overlaps the causal diagonal

    @pl.when(jnp.logical_not(is_diag))
    def _():
        update(False)                    # fully-past block: no mask VALU work

    @pl.when(is_diag)
    def _():
        update(True)

    @pl.when(dn_ref[p] == 1)             # last kv block for this q block
    def _():
        inv_l = pl.reciprocal(l_ref[...], approx=True)
        o_ref[...] = (acc_ref[...] * inv_l).astype(o_ref.dtype)


def pallas_attention(roped_qk, qkv, num_heads, num_kv_heads, head_dim,
                     tq=None, tkv=None):
    # roped_qk: [T, (nH+nKV)*d]   qkv: [T, (nH+2*nKV)*d]   ->  out: [T, nH*d]
    T = roped_qk.shape[0]
    d = _DEFAULTS
    tq = _tile(T, d["attn_tq"] if tq is None else tq, 16)
    tkv = _tile(T, d["attn_tkv"] if tkv is None else tkv, 16)
    nH, nKV = num_heads, num_kv_heads
    g = nH // nKV                          # q heads per kv head (GQA)
    nq, nk = T // tq, T // tkv

    # Lower-triangular (q block, kv block) pairs, ordered j-inner so the output
    # block stays resident across its kv reduction steps.
    qi_l, kj_l, dn_l = [], [], []
    for i in range(nq):
        last = min(nk - 1, (i * tq + tq - 1) // tkv)
        for j in range(last + 1):
            qi_l.append(i)
            kj_l.append(j)
            dn_l.append(1 if j == last else 0)
    qi_arr = jnp.asarray(qi_l, dtype=jnp.int32)
    kj_arr = jnp.asarray(kj_l, dtype=jnp.int32)
    dn_arr = jnp.asarray(dn_l, dtype=jnp.int32)
    num_pairs = len(qi_l)

    kern = functools.partial(_flash_attn_kernel, tq=tq, tkv=tkv)
    # NOTE(v7x megacore): keep the head axis parallel; for production shapes pick
    # tq so T//tq >= 4 to keep both TensorCores busy.
    return pl.pallas_call(
        kern,
        out_shape=jax.ShapeDtypeStruct((T, nH * head_dim), jnp.bfloat16),
        grid_spec=pltpu.PrefetchScalarGridSpec(
            num_scalar_prefetch=3,
            grid=(nH, num_pairs),
            in_specs=[
                pl.BlockSpec((tq, head_dim),
                             lambda h, p, qi, kj, dn: (qi[p], h)),
                pl.BlockSpec((tkv, head_dim),
                             lambda h, p, qi, kj, dn: (kj[p], nH + h // g)),
                pl.BlockSpec((tkv, head_dim),
                             lambda h, p, qi, kj, dn: (kj[p], nH + nKV + h // g)),
            ],
            out_specs=pl.BlockSpec((tq, head_dim),
                                   lambda h, p, qi, kj, dn: (qi[p], h)),
            scratch_shapes=[pltpu.VMEM((tq, 1), jnp.float32),          # m
                            pltpu.VMEM((tq, 1), jnp.float32),          # l
                            pltpu.VMEM((tq, head_dim), jnp.float32)]),  # acc
        compiler_params=pltpu.CompilerParams(
            dimension_semantics=("parallel", "arbitrary"),
            vmem_limit_bytes=d["vmem_limit"]),
    )(qi_arr, kj_arr, dn_arr, roped_qk, roped_qk, qkv)


# ---------------------------------------------------------------------------
# Fused SiLU MLP.  Gate/up weights are stacked as a single [2, H, I] array so
# each grid step issues ONE DMA stream for both blocks.  Grid is (T blocks,
# I blocks) with I as the reduction axis and a resident f32 accumulator.
# Falls back to tiled matmuls when the fused tiles would not fit v7x's VMEM.
# ---------------------------------------------------------------------------
def _mlp_kernel(x_ref, wgu_ref, wd_ref, o_ref, acc_ref):
    @pl.when(pl.program_id(1) == 0)
    def _():
        acc_ref[...] = jnp.zeros_like(acc_ref)

    x = x_ref[...]
    g = jnp.dot(x, wgu_ref[0], preferred_element_type=jnp.float32)
    u = jnp.dot(x, wgu_ref[1], preferred_element_type=jnp.float32)
    h = (g * jax.nn.sigmoid(g)) * u
    acc_ref[...] += jnp.dot(h.astype(wd_ref.dtype), wd_ref[...],
                            preferred_element_type=jnp.float32)

    @pl.when(pl.program_id(1) == pl.num_programs(1) - 1)
    def _():
        o_ref[...] = acc_ref[...].astype(o_ref.dtype)


def _silu_mul_kernel(g_ref, u_ref, o_ref):
    g = g_ref[...].astype(jnp.float32)
    u = u_ref[...].astype(jnp.float32)
    o_ref[...] = (g * jax.nn.sigmoid(g) * u).astype(o_ref.dtype)


def pallas_silu_mul(g, u, tm=256):
    # TODO(synk): for very large intermediate sizes this row-wide block should
    # also be column-tiled; only used on the big-model fallback path.
    T, I = g.shape
    tm = _tile(T, tm, 16)
    return pl.pallas_call(
        _silu_mul_kernel,
        out_shape=jax.ShapeDtypeStruct((T, I), jnp.bfloat16),
        grid=(T // tm,),
        in_specs=[pl.BlockSpec((tm, I), lambda i: (i, 0)),
                  pl.BlockSpec((tm, I), lambda i: (i, 0))],
        out_specs=pl.BlockSpec((tm, I), lambda i: (i, 0)),
        compiler_params=pltpu.CompilerParams(
            dimension_semantics=("parallel",),
            vmem_limit_bytes=_DEFAULTS["vmem_limit"]),
    )(g, u)


def pallas_mlp(x, wgu, wd, tm=None, ti=None):
    d = _DEFAULTS
    x = x.astype(jnp.bfloat16)
    T, H = x.shape
    I = wgu.shape[-1]
    tm = _tile(T, d["mlp_tm"] if tm is None else tm, 16)
    ti = _tile(I, d["mlp_ti"] if ti is None else ti, 256)

    # VMEM estimate for the fused kernel: double-buffered bf16 weight blocks +
    # resident f32 accumulator + double-buffered x / out blocks.
    fused_bytes = (2 * (2 * H * ti * 2)       # stacked gate/up block, 2 bufs
                   + 2 * (ti * H * 2)         # down-proj block, 2 bufs
                   + tm * H * 4               # f32 acc scratch
                   + 2 * (tm * H * 2) * 2)    # x and out blocks, 2 bufs each
    if fused_bytes > d["mlp_budget"]:
        # TODO(synk): an H-tiled fused variant would avoid re-reading the [T, I]
        # activations; the fallback keeps v7x (64 MiB VMEM) compiling at large H.
        g = pallas_matmul(x, wgu[0])
        u = pallas_matmul(x, wgu[1])
        h = pallas_silu_mul(g, u)
        return pallas_matmul(h, wd)

    return pl.pallas_call(
        _mlp_kernel,
        out_shape=jax.ShapeDtypeStruct((T, H), jnp.bfloat16),
        grid=(T // tm, I // ti),
        in_specs=[pl.BlockSpec((tm, H), lambda i, j: (i, 0)),
                  pl.BlockSpec((2, H, ti), lambda i, j: (0, 0, j)),
                  pl.BlockSpec((ti, H), lambda i, j: (j, 0))],
        out_specs=pl.BlockSpec((tm, H), lambda i, j: (i, 0)),
        scratch_shapes=[pltpu.VMEM((tm, H), jnp.float32)],
        compiler_params=pltpu.CompilerParams(
            dimension_semantics=("parallel", "arbitrary"),
            vmem_limit_bytes=d["vmem_limit"]),
    )(x, wgu.astype(jnp.bfloat16), wd.astype(jnp.bfloat16))


# ---------------------------------------------------------------------------
# Model definition (DeciLM: per-layer block configs, some no-op attn / no-op ffn)
# ---------------------------------------------------------------------------
CONFIG = dict(
    vocab_size=256,
    hidden_size=512,
    num_attention_heads=4,
    head_dim=128,           # lane-aligned (real DeciLM also uses 128)
    rms_norm_eps=1e-5,
    rope_theta=10000.0,
    num_hidden_layers=3,
    block_configs=[
        # layer 0: normal attention (GQA group=2) + FFN
        dict(attn_no_op=False, n_heads_in_group=2, ffn_no_op=False, ffn_mult=1.0),
        # layer 1: no-op attention (Nemotron-NAS specialty), FFN only
        dict(attn_no_op=True, n_heads_in_group=None, ffn_no_op=False, ffn_mult=2.0),
        # layer 2: attention (GQA group=4), no-op FFN
        dict(attn_no_op=False, n_heads_in_group=4, ffn_no_op=True, ffn_mult=None),
    ],
)


def init_params(key, cfg):
    H = cfg["hidden_size"]
    V = cfg["vocab_size"]
    nH = cfg["num_attention_heads"]
    d = cfg["head_dim"]
    std = 0.02

    params = {}
    key, k = jax.random.split(key)
    params["embed_tokens"] = jax.random.normal(k, (V, H), jnp.float32) * std

    layers = []
    for blk in cfg["block_configs"]:
        lp = {}
        if not blk["attn_no_op"]:
            nKV = nH // blk["n_heads_in_group"]
            key, k0, k1, k2, k3, k4 = jax.random.split(key, 6)
            lp["num_kv_heads"] = nKV
            lp["input_ln"] = 1.0 + 0.05 * jax.random.normal(k0, (H,), jnp.float32)
            wq = jax.random.normal(k1, (H, nH * d), jnp.float32) * std
            wk = jax.random.normal(k2, (H, nKV * d), jnp.float32) * std
            wv = jax.random.normal(k3, (H, nKV * d), jnp.float32) * std
            # fused QKV projection weight (one matmul launch, one read of `hidden`)
            lp["wqkv"] = jnp.concatenate([wq, wk, wv], axis=1).astype(jnp.bfloat16)
            lp["wo"] = (jax.random.normal(k4, (nH * d, H), jnp.float32) * std
                        ).astype(jnp.bfloat16)
        if not blk["ffn_no_op"]:
            I = _ffn_mult_to_intermediate_size(blk["ffn_mult"], H)
            key, k0, k1, k2, k3 = jax.random.split(key, 5)
            lp["post_ln"] = 1.0 + 0.05 * jax.random.normal(k0, (H,), jnp.float32)
            wg = jax.random.normal(k1, (H, I), jnp.float32) * std
            wu = jax.random.normal(k2, (H, I), jnp.float32) * std
            lp["wgu"] = jnp.stack([wg, wu], axis=0).astype(jnp.bfloat16)   # [2, H, I]
            lp["wd"] = (jax.random.normal(k3, (I, H), jnp.float32) * std).astype(jnp.bfloat16)
        layers.append(lp)
    params["layers"] = layers

    key, k = jax.random.split(key)
    params["norm"] = 1.0 + 0.05 * jax.random.normal(k, (H,), jnp.float32)
    return params


def deci_forward(params, cfg, input_ids, positions):
    H = cfg["hidden_size"]
    nH = cfg["num_attention_heads"]
    d = cfg["head_dim"]
    eps = cfg["rms_norm_eps"]
    T = input_ids.shape[0]

    # embedding lookup (glue); activations and residual stream flow bf16
    hidden = params["embed_tokens"][input_ids].astype(jnp.bfloat16)   # [T, H]
    residual = None

    # rotary tables (glue), pre-expanded to full head_dim for lane-dense RoPE blocks
    d2 = d // 2
    inv_freq = 1.0 / (cfg["rope_theta"] ** (jnp.arange(0, d2, dtype=jnp.float32) * 2.0 / d))
    freqs = positions.astype(jnp.float32)[:, None] * inv_freq[None, :]   # [T, d/2]
    cos = jnp.cos(freqs)
    sin = jnp.sin(freqs)
    cos2 = jnp.concatenate([cos, cos], axis=-1)     # [T, d]
    sin2 = jnp.concatenate([-sin, sin], axis=-1)    # rotate-half sign pattern

    for blk, lp in zip(cfg["block_configs"], params["layers"]):
        if not blk["attn_no_op"]:
            if residual is None:
                hidden, residual = pallas_rmsnorm(hidden, lp["input_ln"], eps)
            else:
                hidden, residual = pallas_rmsnorm_add(hidden, residual, lp["input_ln"], eps)

            nKV = lp["num_kv_heads"]
            qkv = pallas_matmul(hidden, lp["wqkv"])              # [T, (nH+2nKV)*d]
            # RoPE over Q+K head blocks of the slab, Q pre-scaled by 1/sqrt(d)
            roped_qk = pallas_rope_qk(qkv, cos2, sin2, nH, nKV, d)
            attn_out = pallas_attention(roped_qk, qkv, nH, nKV, d)   # [T, nH*d]
            hidden = pallas_matmul(attn_out, lp["wo"])               # o_proj

        if not blk["ffn_no_op"]:
            if residual is None:
                hidden, residual = pallas_rmsnorm(hidden, lp["post_ln"], eps)
            else:
                hidden, residual = pallas_rmsnorm_add(hidden, residual, lp["post_ln"], eps)
            hidden = pallas_mlp(hidden, lp["wgu"], lp["wd"])

    # final model norm: norm(hidden_states, residual)
    if residual is None:
        hidden, _ = pallas_rmsnorm(hidden, params["norm"], eps)
    else:
        hidden, _ = pallas_rmsnorm_add(hidden, residual, params["norm"], eps)
    return hidden


if __name__ == "__main__":
    cfg = CONFIG
    key = jax.random.PRNGKey(0)
    key, pkey, ikey = jax.random.split(key, 3)
    params = init_params(pkey, cfg)

    T = 128
    input_ids = jax.random.randint(ikey, (T,), 0, cfg["vocab_size"], dtype=jnp.int32)
    positions = jnp.arange(T, dtype=jnp.int32)

    out = deci_forward(params, cfg, input_ids, positions)
    out = jax.block_until_ready(out)

    assert out.shape == (T, cfg["hidden_size"]), out.shape
    assert bool(jnp.all(jnp.isfinite(out.astype(jnp.float32))))
    print("KERNEL_OK")
</pallas_src>

<mosaic_0001>
module attributes {stable_mosaic.version = 11 : i64} {
  func.func @_rmsnorm_kernel(%arg0: i32, %arg1: memref<128x512xbf16, #tpu.memory_space<vmem>>, %arg2: memref<1x512xf32, #tpu.memory_space<vmem>>, %arg3: memref<128x512xbf16, #tpu.memory_space<vmem>>, %arg4: memref<128x512xbf16, #tpu.memory_space<vmem>>) attributes {dimension_semantics = [#tpu.dimension_semantics<parallel>], iteration_bounds = array<i64: 1>, scalar_prefetch = 0 : i64, scratch_operands = 0 : i64, tpu.core_type = #tpu.core_type<tc>, window_params = [{transform_indices = @transform_0, window_bounds = array<i64: 128, 512>}, {pipeline_mode = #tpu.pipeline_mode<synchronous>, transform_indices = @transform_1, window_bounds = array<i64: 1, 512>}, {transform_indices = @transform_2, window_bounds = array<i64: 128, 512>}, {transform_indices = @transform_3, window_bounds = array<i64: 128, 512>}]} {
    %c0 = arith.constant 0 : index
    %c0_0 = arith.constant 0 : index
    %0 = vector.load %arg1[%c0, %c0_0] : memref<128x512xbf16, #tpu.memory_space<vmem>>, vector<128x512xbf16>
    %1 = arith.extf %0 : vector<128x512xbf16> to vector<128x512xf32>
    %2 = arith.truncf %1 : vector<128x512xf32> to vector<128x512xbf16>
    %c0_1 = arith.constant 0 : index
    %c0_2 = arith.constant 0 : index
    %3 = vector.load %arg4[%c0_1, %c0_2] : memref<128x512xbf16, #tpu.memory_space<vmem>>, vector<128x512xbf16>
    tpu.vector_store %arg4[%c0_1, %c0_2], %2 {strides = array<i32>} : memref<128x512xbf16, #tpu.memory_space<vmem>>, vector<128x512xbf16>,
    %4 = arith.mulf %1, %1 : vector<128x512xf32>
    %cst = arith.constant dense<0.000000e+00> : vector<128xf32>
    %5 = vector.multi_reduction <add>, %4, %cst [1] : vector<128x512xf32> to vector<128xf32>
    %6 = vector.shape_cast %5 : vector<128xf32> to vector<128x1xf32>
    %cst_3 = arith.constant 5.120000e+02 : f32
    %7 = vector.broadcast %cst_3 : f32 to vector<128x1xf32>
    %8 = arith.divf %6, %7 : vector<128x1xf32>
    %cst_4 = arith.constant 9.99999974E-6 : f32
    %9 = vector.broadcast %cst_4 : f32 to vector<128x1xf32>
    %10 = arith.addf %8, %9 : vector<128x1xf32>
    %11 = math.rsqrt %10 : vector<128x1xf32>
    %12 = vector.broadcast %11 : vector<128x1xf32> to vector<128x512xf32>
    %13 = arith.mulf %1, %12 : vector<128x512xf32>
    %c0_5 = arith.constant 0 : index
    %c0_6 = arith.constant 0 : index
    %14 = vector.load %arg2[%c0_5, %c0_6] : memref<1x512xf32, #tpu.memory_space<vmem>>, vector<1x512xf32>
    %15 = vector.broadcast %14 : vector<1x512xf32> to vector<128x512xf32>
    %16 = arith.mulf %13, %15 : vector<128x512xf32>
    %17 = arith.truncf %16 : vector<128x512xf32> to vector<128x512xbf16>
    %c0_7 = arith.constant 0 : index
    %c0_8 = arith.constant 0 : index
    %18 = vector.load %arg3[%c0_7, %c0_8] : memref<128x512xbf16, #tpu.memory_space<vmem>>, vector<128x512xbf16>
    tpu.vector_store %arg3[%c0_7, %c0_8], %17 {strides = array<i32>} : memref<128x512xbf16, #tpu.memory_space<vmem>>, vector<128x512xbf16>,
    return
  }
  func.func @transform_0(%arg0: i32) -> (i32, i32) {
    %c0_i32 = arith.constant 0 : i32
    %c0_i32_0 = arith.constant 0 : i32
    return %arg0, %c0_i32 : i32, i32
  }
  func.func @transform_1(%arg0: i32) -> (i32, i32) {
    %c0_i32 = arith.constant 0 : i32
    %c0_i32_0 = arith.constant 0 : i32
    %c0_i32_1 = arith.constant 0 : i32
    return %c0_i32, %c0_i32_0 : i32, i32
  }
  func.func @transform_2(%arg0: i32) -> (i32, i32) {
    %c0_i32 = arith.constant 0 : i32
    %c0_i32_0 = arith.constant 0 : i32
    return %arg0, %c0_i32 : i32, i32
  }
  func.func @transform_3(%arg0: i32) -> (i32, i32) {
    %c0_i32 = arith.constant 0 : i32
    %c0_i32_0 = arith.constant 0 : i32
    return %arg0, %c0_i32 : i32, i32
  }
}

</mosaic_0001>

<llo_original>
// kernel: tpu_custom_call.1
$region0: #{tpu_custom_call.1}
  #allocation0 [shape = 'u32[]', space=smem, size = 0x4, offset = 0x4, fixed_abs, tag = 'smem constant byte address 0x4 - core index']
  #allocation1 [shape = 'u32[144,128]{1,0:T(1,128)}', space=vmem, size = 0x12000, scoped, tag = 'internal scratch']
  %s0 = inlined_call_operand.hbm [shape: bf16[128,512], index: 0, kind: input, shape index: {}]
  %s1 = inlined_call_operand.hbm [shape: f32[1,512], index: 1, kind: input, shape index: {}]
  %s2 = inlined_call_operand.hbm [shape: bf16[128,512], index: 2, kind: output, shape index: {0}]
  %s3 = inlined_call_operand.hbm [shape: bf16[128,512], index: 3, kind: output, shape index: {1}]
  %4 = xla_tuple %s2, %s3
  %s5 = sld [smem:[#allocation0]]
  $region34: #{tpu_custom_call.1} parent=0
    _
  %s7 = ssub.s32 1, %s5
  %s8 = scalar_select 0, %s7, %s5
  $region1: #{tpu_custom_call.1} parent=0
    #allocation2 [shape = 'u8[131072]{0}', space=vmem, size = 0x20000, scoped, tag = 'input window, operand 0, single buffered']
    #allocation3 [shape = 's32[1]{0}', space=sflag, size = 0x4, scoped, tag = 'scoped memory for tpu_custom_call.1']
    #allocation4 [shape = 's32[1]{0}', space=sflag, size = 0x4, scoped, tag = 'scoped memory for tpu_custom_call.1']
    #allocation5 [shape = 'u8[2048]{0}', space=vmem, size = 0x800, scoped, tag = 'input window, operand 1, single buffered']
    #allocation6 [shape = 's32[1]{0}', space=sflag, size = 0x4, scoped, tag = 'scoped memory for tpu_custom_call.1']
    #allocation7 [shape = 'u8[131072]{0}', space=vmem, size = 0x20000, scoped, tag = 'output window, operand 0, single buffered']
    #allocation8 [shape = 'u8[131072]{0}', space=vmem, size = 0x20000, scoped, tag = 'output window, operand 1, single buffered']
    #allocation9 [shape = 's32[1]{0}', space=sflag, size = 0x4, scoped, tag = 'scoped memory for tpu_custom_call.1']
    %9 = vsyncpa [#allocation3], 0
    %10 = vsyncpa [#allocation6], 0
    %11 = vsyncpa [#allocation4], 0
    %12 = vsyncpa [#allocation9], 0
    // Predicated region
    $region2: #{tpu_custom_call.1} parent=1 // pred_check
      _
    $region3: #{tpu_custom_call.1} parent=1 // pred_check_branch
      %14 = sbr.rel (0) target = $region5
    $region4: #{tpu_custom_call.1} parent=1 // pred_region
      %s16 = ssub.s32 4096, 4096
      %17 = vsyncadd [#allocation3], %s16
      %s18 = sshll.u32 [#allocation2], 4
      %s19 = int_to_ptr.vmem [resolvable:$true] %s18
      %24 = dma.hbm_to_vmem [thread:$0]  %s0, 4096, %s19, [#allocation3], 256, 256, 16
    $region5: #{tpu_custom_call.1} parent=1 // pred_fallthru
      _
    // Predicated region
    $region6: #{tpu_custom_call.1} parent=1 // pred_check
      _
    $region7: #{tpu_custom_call.1} parent=1 // pred_check_branch
      %26 = sbr.rel (0) target = $region9
    $region8: #{tpu_custom_call.1} parent=1 // pred_region
      %s28 = ssub.s32 64, 64
      %29 = vsyncadd [#allocation6], %s28
      %s31 = sshll.u32 [#allocation5], 4
      %s32 = int_to_ptr.vmem [resolvable:$true] %s31
      %34 = dma.hbm_to_vmem [thread:$0]  %s1, 64, %s32, [#allocation6]
    $region9: #{tpu_custom_call.1} parent=1 // pred_fallthru
      _
    // Predicated region
    $region10: #{tpu_custom_call.1} parent=1 // pred_check
      _
    $region11: #{tpu_custom_call.1} parent=1 // pred_check_branch
      %36 = sbr.rel (0) target = $region13
    $region12: #{tpu_custom_call.1} parent=1 // pred_region
      %37 = dma.done [#allocation3], 4096
    $region13: #{tpu_custom_call.1} parent=1 // pred_fallthru
      _
    // Predicated region
    $region14: #{tpu_custom_call.1} parent=1 // pred_check
      _
    $region15: #{tpu_custom_call.1} parent=1 // pred_check_branch
      %39 = sbr.rel (0) target = $region17
    $region16: #{tpu_custom_call.1} parent=1 // pred_region
      %40 = dma.done [#allocation6], 64
    $region17: #{tpu_custom_call.1} parent=1 // pred_fallthru
      _
    %v41 = vld [vmem:[#allocation2] sm:$0xff]
    %v42 = vld [vmem:[#allocation2 + $0x8] sm:$0xff]
    %v43 = vld [vmem:[#allocation2 + $0x10] sm:$0xff]
    %v44 = vld [vmem:[#allocation2 + $0x18] sm:$0xff]
    %v45 = vld [vmem:[#allocation2 + $0x20] sm:$0xff]
    %v46 = vld [vmem:[#allocation2 + $0x28] sm:$0xff]
    %v47 = vld [vmem:[#allocation2 + $0x30] sm:$0xff]
    %v48 = vld [vmem:[#allocation2 + $0x38] sm:$0xff]
    %v49 = vld [vmem:[#allocation2 + $0x40] sm:$0xff]
    %v50 = vld [vmem:[#allocation2 + $0x48] sm:$0xff]
    %v51 = vld [vmem:[#allocation2 + $0x50] sm:$0xff]
    %v52 = vld [vmem:[#allocation2 + $0x58] sm:$0xff]
    %v53 = vld [vmem:[#allocation2 + $0x60] sm:$0xff]
    %v54 = vld [vmem:[#allocation2 + $0x68] sm:$0xff]
    %v55 = vld [vmem:[#allocation2 + $0x70] sm:$0xff]
    %v56 = vld [vmem:[#allocation2 + $0x78] sm:$0xff]
    %v57 = vld [vmem:[#allocation2 + $0x80] sm:$0xff]
    %v58 = vld [vmem:[#allocation2 + $0x88] sm:$0xff]
    %v59 = vld [vmem:[#allocation2 + $0x90] sm:$0xff]
    %v60 = vld [vmem:[#allocation2 + $0x98] sm:$0xff]
    %v61 = vld [vmem:[#allocation2 + $0xa0] sm:$0xff]
    %v62 = vld [vmem:[#allocation2 + $0xa8] sm:$0xff]
    %v63 = vld [vmem:[#allocation2 + $0xb0] sm:$0xff]
    %v64 = vld [vmem:[#allocation2 + $0xb8] sm:$0xff]
    %v65 = vld [vmem:[#allocation2 + $0xc0] sm:$0xff]
    %v66 = vld [vmem:[#allocation2 + $0xc8] sm:$0xff]
    %v67 = vld [vmem:[#allocation2 + $0xd0] sm:$0xff]
    %v68 = vld [vmem:[#allocation2 + $0xd8] sm:$0xff]
    %v69 = vld [vmem:[#allocation2 + $0xe0] sm:$0xff]
    %v70 = vld [vmem:[#allocation2 + $0xe8] sm:$0xff]
    %v71 = vld [vmem:[#allocation2 + $0xf0] sm:$0xff]
    %v72 = vld [vmem:[#allocation2 + $0xf8] sm:$0xff]
    %v73 = vunpack.c.l.bf16 %v41
    %v74 = vunpack.c.h.bf16 %v41
    %v75 = vunpack.c.l.bf16 %v42
    %v76 = vunpack.c.h.bf16 %v42
    %v77 = vunpack.c.l.bf16 %v43
    %v78 = vunpack.c.h.bf16 %v43
    %v79 = vunpack.c.l.bf16 %v44
    %v80 = vunpack.c.h.bf16 %v44
    %v81 = vunpack.c.l.bf16 %v45
    %v82 = vunpack.c.h.bf16 %v45
    %v83 = vunpack.c.l.bf16 %v46
    %v84 = vunpack.c.h.bf16 %v46
    %v85 = vunpack.c.l.bf16 %v47
    %v86 = vunpack.c.h.bf16 %v47
    %v87 = vunpack.c.l.bf16 %v48
    %v88 = vunpack.c.h.bf16 %v48
    %v89 = vunpack.c.l.bf16 %v49
    %v90 = vunpack.c.h.bf16 %v49
    %v91 = vunpack.c.l.bf16 %v50
    %v92 = vunpack.c.h.bf16 %v50
    %v93 = vunpack.c.l.bf16 %v51
    %v94 = vunpack.c.h.bf16 %v51
    %v95 = vunpack.c.l.bf16 %v52
    %v96 = vunpack.c.h.bf16 %v52
    %v97 = vunpack.c.l.bf16 %v53
    %v98 = vunpack.c.h.bf16 %v53
    %v99 = vunpack.c.l.bf16 %v54
    %v100 = vunpack.c.h.bf16 %v54
    %v101 = vunpack.c.l.bf16 %v55
    %v102 = vunpack.c.h.bf16 %v55
    %v103 = vunpack.c.l.bf16 %v56
    %v104 = vunpack.c.h.bf16 %v56
    %v105 = vunpack.c.l.bf16 %v57
    %v106 = vunpack.c.h.bf16 %v57
    %v107 = vunpack.c.l.bf16 %v58
    %v108 = vunpack.c.h.bf16 %v58
    %v109 = vunpack.c.l.bf16 %v59
    %v110 = vunpack.c.h.bf16 %v59
    %v111 = vunpack.c.l.bf16 %v60
    %v112 = vunpack.c.h.bf16 %v60
    %v113 = vunpack.c.l.bf16 %v61
    %v114 = vunpack.c.h.bf16 %v61
    %v115 = vunpack.c.l.bf16 %v62
    %v116 = vunpack.c.h.bf16 %v62
    %v117 = vunpack.c.l.bf16 %v63
    %v118 = vunpack.c.h.bf16 %v63
    %v119 = vunpack.c.l.bf16 %v64
    %v120 = vunpack.c.h.bf16 %v64
    %v121 = vunpack.c.l.bf16 %v65
    %v122 = vunpack.c.h.bf16 %v65
    %v123 = vunpack.c.l.bf16 %v66
    %v124 = vunpack.c.h.bf16 %v66
    %v125 = vunpack.c.l.bf16 %v67
    %v126 = vunpack.c.h.bf16 %v67
    %v127 = vunpack.c.l.bf16 %v68
    %v128 = vunpack.c.h.bf16 %v68
    %v129 = vunpack.c.l.bf16 %v69
    %v130 = vunpack.c.h.bf16 %v69
    %v131 = vunpack.c.l.bf16 %v70
    %v132 = vunpack.c.h.bf16 %v70
    %v133 = vunpack.c.l.bf16 %v71
    %v134 = vunpack.c.h.bf16 %v71
    %v135 = vunpack.c.l.bf16 %v72
    %v136 = vunpack.c.h.bf16 %v72
    %137 = vst [vmem:[#allocation8] sm:$0xff] %v41
    %138 = vst [vmem:[#allocation8 + $0x8] sm:$0xff] %v42
    %139 = vst [vmem:[#allocation8 + $0x10] sm:$0xff] %v43
    %140 = vst [vmem:[#allocation8 + $0x18] sm:$0xff] %v44
    %141 = vst [vmem:[#allocation8 + $0x20] sm:$0xff] %v45
    %142 = vst [vmem:[#allocation8 + $0x28] sm:$0xff] %v46
    %143 = vst [vmem:[#allocation8 + $0x30] sm:$0xff] %v47
    %144 = vst [vmem:[#allocation8 + $0x38] sm:$0xff] %v48
    %145 = vst [vmem:[#allocation8 + $0x40] sm:$0xff] %v49
    %146 = vst [vmem:[#allocation8 + $0x48] sm:$0xff] %v50
    %147 = vst [vmem:[#allocation8 + $0x50] sm:$0xff] %v51
    %148 = vst [vmem:[#allocation8 + $0x58] sm:$0xff] %v52
    %149 = vst [vmem:[#allocation8 + $0x60] sm:$0xff] %v53
    %150 = vst [vmem:[#allocation8 + $0x68] sm:$0xff] %v54
    %151 = vst [vmem:[#allocation8 + $0x70] sm:$0xff] %v55
    %152 = vst [vmem:[#allocation8 + $0x78] sm:$0xff] %v56
    %153 = vst [vmem:[#allocation8 + $0x80] sm:$0xff] %v57
    %154 = vst [vmem:[#allocation8 + $0x88] sm:$0xff] %v58
    %155 = vst [vmem:[#allocation8 + $0x90] sm:$0xff] %v59
    %156 = vst [vmem:[#allocation8 + $0x98] sm:$0xff] %v60
    %157 = vst [vmem:[#allocation8 + $0xa0] sm:$0xff] %v61
    %158 = vst [vmem:[#allocation8 + $0xa8] sm:$0xff] %v62
    %159 = vst [vmem:[#allocation8 + $0xb0] sm:$0xff] %v63
    %160 = vst [vmem:[#allocation8 + $0xb8] sm:$0xff] %v64
    %161 = vst [vmem:[#allocation8 + $0xc0] sm:$0xff] %v65
    %162 = vst [vmem:[#allocation8 + $0xc8] sm:$0xff] %v66
    %163 = vst [vmem:[#allocation8 + $0xd0] sm:$0xff] %v67
    %164 = vst [vmem:[#allocation8 + $0xd8] sm:$0xff] %v68
    %165 = vst [vmem:[#allocation8 + $0xe0] sm:$0xff] %v69
    %166 = vst [vmem:[#allocation8 + $0xe8] sm:$0xff] %v70
    %167 = vst [vmem:[#allocation8 + $0xf0] sm:$0xff] %v71
    %168 = vst [vmem:[#allocation8 + $0xf8] sm:$0xff] %v72
    %v169 = vmul.f32 %v73, %v73
    %v170 = vmul.f32 %v74, %v74
    %v171 = vmul.f32 %v75, %v75
    %v172 = vmul.f32 %v76, %v76
    %v173 = vmul.f32 %v77, %v77
    %v174 = vmul.f32 %v78, %v78
    %v175 = vmul.f32 %v79, %v79
    %v176 = vmul.f32 %v80, %v80
    %v177 = vmul.f32 %v81, %v81
    %v178 = vmul.f32 %v82, %v82
    %v179 = vmul.f32 %v83, %v83
    %v180 = vmul.f32 %v84, %v84
    %v181 = vmul.f32 %v85, %v85
    %v182 = vmul.f32 %v86, %v86
    %v183 = vmul.f32 %v87, %v87
    %v184 = vmul.f32 %v88, %v88
    %v185 = vmul.f32 %v89, %v89
    %v186 = vmul.f32 %v90, %v90
    %v187 = vmul.f32 %v91, %v91
    %v188 = vmul.f32 %v92, %v92
    %v189 = vmul.f32 %v93, %v93
    %v190 = vmul.f32 %v94, %v94
    %v191 = vmul.f32 %v95, %v95
    %v192 = vmul.f32 %v96, %v96
    %v193 = vmul.f32 %v97, %v97
    %v194 = vmul.f32 %v98, %v98
    %v195 = vmul.f32 %v99, %v99
    %v196 = vmul.f32 %v100, %v100
    %v197 = vmul.f32 %v101, %v101
    %v198 = vmul.f32 %v102, %v102
    %v199 = vmul.f32 %v103, %v103
    %v200 = vmul.f32 %v104, %v104
    %v201 = vmul.f32 %v105, %v105
    %v202 = vmul.f32 %v106, %v106
    %v203 = vmul.f32 %v107, %v107
    %v204 = vmul.f32 %v108, %v108
    %v205 = vmul.f32 %v109, %v109
    %v206 = vmul.f32 %v110, %v110
    %v207 = vmul.f32 %v111, %v111
    %v208 = vmul.f32 %v112, %v112
    %v209 = vmul.f32 %v113, %v113
    %v210 = vmul.f32 %v114, %v114
    %v211 = vmul.f32 %v115, %v115
    %v212 = vmul.f32 %v116, %v116
    %v213 = vmul.f32 %v117, %v117
    %v214 = vmul.f32 %v118, %v118
    %v215 = vmul.f32 %v119, %v119
    %v216 = vmul.f32 %v120, %v120
    %v217 = vmul.f32 %v121, %v121
    %v218 = vmul.f32 %v122, %v122
    %v219 = vmul.f32 %v123, %v123
    %v220 = vmul.f32 %v124, %v124
    %v221 = vmul.f32 %v125, %v125
    %v222 = vmul.f32 %v126, %v126
    %v223 = vmul.f32 %v127, %v127
    %v224 = vmul.f32 %v128, %v128
    %v225 = vmul.f32 %v129, %v129
    %v226 = vmul.f32 %v130, %v130
    %v227 = vmul.f32 %v131, %v131
    %v228 = vmul.f32 %v132, %v132
    %v229 = vmul.f32 %v133, %v133
    %v230 = vmul.f32 %v134, %v134
    %v231 = vmul.f32 %v135, %v135
    %v232 = vmul.f32 %v136, %v136
    %v233 = vadd.f32 %v169, %v170
    %v234 = vadd.f32 %v233, %v171
    %v235 = vadd.f32 %v234, %v172
    %236 = vadd.xlane.f32.xlu0 %v235
    %v237 = vpop.xlane.xlu0 %236
    %v238 = vadd.f32 %v173, %v174
    %v239 = vadd.f32 %v238, %v175
    %v240 = vadd.f32 %v239, %v176
    %241 = vadd.xlane.f32.xlu0 %v240
    %v242 = vpop.xlane.xlu0 %241
    %v243 = vadd.f32 %v177, %v178
    %v244 = vadd.f32 %v243, %v179
    %v245 = vadd.f32 %v244, %v180
    %246 = vadd.xlane.f32.xlu0 %v245
    %v247 = vpop.xlane.xlu0 %246
    %v248 = vadd.f32 %v181, %v182
    %v249 = vadd.f32 %v248, %v183
    %v250 = vadd.f32 %v249, %v184
    %251 = vadd.xlane.f32.xlu0 %v250
    %v252 = vpop.xlane.xlu0 %251
    %v253 = vadd.f32 %v185, %v186
    %v254 = vadd.f32 %v253, %v187
    %v255 = vadd.f32 %v254, %v188
    %256 = vadd.xlane.f32.xlu0 %v255
    %v257 = vpop.xlane.xlu0 %256
    %v258 = vadd.f32 %v189, %v190
    %v259 = vadd.f32 %v258, %v191
    %v260 = vadd.f32 %v259, %v192
    %261 = vadd.xlane.f32.xlu0 %v260
    %v262 = vpop.xlane.xlu0 %261
    %v263 = vadd.f32 %v193, %v194
    %v264 = vadd.f32 %v263, %v195
    %v265 = vadd.f32 %v264, %v196
    %266 = vadd.xlane.f32.xlu0 %v265
    %v267 = vpop.xlane.xlu0 %266
    %v268 = vadd.f32 %v197, %v198
    %v269 = vadd.f32 %v268, %v199
    %v270 = vadd.f32 %v269, %v200
    %271 = vadd.xlane.f32.xlu0 %v270
    %v272 = vpop.xlane.xlu0 %271
    %v273 = vadd.f32 %v201, %v202
    %v274 = vadd.f32 %v273, %v203
    %v275 = vadd.f32 %v274, %v204
    %276 = vadd.xlane.f32.xlu0 %v275
    %v277 = vpop.xlane.xlu0 %276
    %v278 = vadd.f32 %v205, %v206
    %v279 = vadd.f32 %v278, %v207
    %v280 = vadd.f32 %v279, %v208
    %281 = vadd.xlane.f32.xlu0 %v280
    %v282 = vpop.xlane.xlu0 %281
    %v283 = vadd.f32 %v209, %v210
    %v284 = vadd.f32 %v283, %v211
    %v285 = vadd.f32 %v284, %v212
    %286 = vadd.xlane.f32.xlu0 %v285
    %v287 = vpop.xlane.xlu0 %286
    %v288 = vadd.f32 %v213, %v214
    %v289 = vadd.f32 %v288, %v215
    %v290 = vadd.f32 %v289, %v216
    %291 = vadd.xlane.f32.xlu0 %v290
    %v292 = vpop.xlane.xlu0 %291
    %v293 = vadd.f32 %v217, %v218
    %v294 = vadd.f32 %v293, %v219
    %v295 = vadd.f32 %v294, %v220
    %296 = vadd.xlane.f32.xlu0 %v295
    %v297 = vpop.xlane.xlu0 %296
    %v298 = vadd.f32 %v221, %v222
    %v299 = vadd.f32 %v298, %v223
    %v300 = vadd.f32 %v299, %v224
    %301 = vadd.xlane.f32.xlu0 %v300
    %v302 = vpop.xlane.xlu0 %301
    %v303 = vadd.f32 %v225, %v226
    %v304 = vadd.f32 %v303, %v227
    %v305 = vadd.f32 %v304, %v228
    %306 = vadd.xlane.f32.xlu0 %v305
    %v307 = vpop.xlane.xlu0 %306
    %v308 = vadd.f32 %v229, %v230
    %v309 = vadd.f32 %v308, %v231
    %v310 = vadd.f32 %v309, %v232
    %311 = vadd.xlane.f32.xlu0 %v310
    %v312 = vpop.xlane.xlu0 %311
    %v313 = vrcp.pop 512.0
    %v314 = vmul.f32 %v237, %v313
    %v315 = vmul.f32 %v242, %v313
    %v316 = vmul.f32 %v247, %v313
    %v317 = vmul.f32 %v252, %v313
    %v318 = vmul.f32 %v257, %v313
    %v319 = vmul.f32 %v262, %v313
    %v320 = vmul.f32 %v267, %v313
    %v321 = vmul.f32 %v272, %v313
    %v322 = vmul.f32 %v277, %v313
    %v323 = vmul.f32 %v282, %v313
    %v324 = vmul.f32 %v287, %v313
    %v325 = vmul.f32 %v292, %v313
    %v326 = vmul.f32 %v297, %v313
    %v327 = vmul.f32 %v302, %v313
    %v328 = vmul.f32 %v307, %v313
    %v329 = vmul.f32 %v312, %v313
    %v330 = vadd.f32 %v314, 1e-05
    %v331 = vadd.f32 %v315, 1e-05
    %v332 = vadd.f32 %v316, 1e-05
    %v333 = vadd.f32 %v317, 1e-05
    %v334 = vadd.f32 %v318, 1e-05
    %v335 = vadd.f32 %v319, 1e-05
    %v336 = vadd.f32 %v320, 1e-05
    %v337 = vadd.f32 %v321, 1e-05
    %v338 = vadd.f32 %v322, 1e-05
    %v339 = vadd.f32 %v323, 1e-05
    %v340 = vadd.f32 %v324, 1e-05
    %v341 = vadd.f32 %v325, 1e-05
    %v342 = vadd.f32 %v326, 1e-05
    %v343 = vadd.f32 %v327, 1e-05
    %v344 = vadd.f32 %v328, 1e-05
    %v345 = vadd.f32 %v329, 1e-05
    %v346 = vrsqrt.pop %v330
    %v347 = vrsqrt.pop %v331
    %v348 = vrsqrt.pop %v332
    %v349 = vrsqrt.pop %v333
    %v350 = vrsqrt.pop %v334
    %v351 = vrsqrt.pop %v335
    %v352 = vrsqrt.pop %v336
    %v353 = vrsqrt.pop %v337
    %v354 = vrsqrt.pop %v338
    %v355 = vrsqrt.pop %v339
    %v356 = vrsqrt.pop %v340
    %v357 = vrsqrt.pop %v341
    %v358 = vrsqrt.pop %v342
    %v359 = vrsqrt.pop %v343
    %v360 = vrsqrt.pop %v344
    %v361 = vrsqrt.pop %v345
    %v362 = vmul.f32 %v73, %v346
    %v363 = vmul.f32 %v74, %v346
    %v364 = vmul.f32 %v75, %v346
    %v365 = vmul.f32 %v76, %v346
    %v366 = vmul.f32 %v77, %v347
    %v367 = vmul.f32 %v78, %v347
    %v368 = vmul.f32 %v79, %v347
    %v369 = vmul.f32 %v80, %v347
    %v370 = vmul.f32 %v81, %v348
    %v371 = vmul.f32 %v82, %v348
    %v372 = vmul.f32 %v83, %v348
    %v373 = vmul.f32 %v84, %v348
    %v374 = vmul.f32 %v85, %v349
    %v375 = vmul.f32 %v86, %v349
    %v376 = vmul.f32 %v87, %v349
    %v377 = vmul.f32 %v88, %v349
    %v378 = vmul.f32 %v89, %v350
    %v379 = vmul.f32 %v90, %v350
    %v380 = vmul.f32 %v91, %v350
    %v381 = vmul.f32 %v92, %v350
    %v382 = vmul.f32 %v93, %v351
    %v383 = vmul.f32 %v94, %v351
    %v384 = vmul.f32 %v95, %v351
    %v385 = vmul.f32 %v96, %v351
    %v386 = vmul.f32 %v97, %v352
    %v387 = vmul.f32 %v98, %v352
    %v388 = vmul.f32 %v99, %v352
    %v389 = vmul.f32 %v100, %v352
    %v390 = vmul.f32 %v101, %v353
    %v391 = vmul.f32 %v102, %v353
    %v392 = vmul.f32 %v103, %v353
    %v393 = vmul.f32 %v104, %v353
    %v394 = vmul.f32 %v105, %v354
    %v395 = vmul.f32 %v106, %v354
    %v396 = vmul.f32 %v107, %v354
    %v397 = vmul.f32 %v108, %v354
    %v398 = vmul.f32 %v109, %v355
    %v399 = vmul.f32 %v110, %v355
    %v400 = vmul.f32 %v111, %v355
    %v401 = vmul.f32 %v112, %v355
    %v402 = vmul.f32 %v113, %v356
    %v403 = vmul.f32 %v114, %v356
    %v404 = vmul.f32 %v115, %v356
    %v405 = vmul.f32 %v116, %v356
    %v406 = vmul.f32 %v117, %v357
    %v407 = vmul.f32 %v118, %v357
    %v408 = vmul.f32 %v119, %v357
    %v409 = vmul.f32 %v120, %v357
    %v410 = vmul.f32 %v121, %v358
    %v411 = vmul.f32 %v122, %v358
    %v412 = vmul.f32 %v123, %v358
    %v413 = vmul.f32 %v124, %v358
    %v414 = vmul.f32 %v125, %v359
    %v415 = vmul.f32 %v126, %v359
    %v416 = vmul.f32 %v127, %v359
    %v417 = vmul.f32 %v128, %v359
    %v418 = vmul.f32 %v129, %v360
    %v419 = vmul.f32 %v130, %v360
    %v420 = vmul.f32 %v131, %v360
    %v421 = vmul.f32 %v132, %v360
    %v422 = vmul.f32 %v133, %v361
    %v423 = vmul.f32 %v134, %v361
    %v424 = vmul.f32 %v135, %v361
    %v425 = vmul.f32 %v136, %v361
    %v426 = vld [vmem:[#allocation5] sm:$0xf]
    %v428 = vlaneseq
    %v429 = vshrl.u32 %v428, 7
    %v430 = vsub.s32 0, %v429
    %v431 = vrot.slane %v426, %v430
    %v432 = vlaneseq
    %v433 = vshrl.u32 %v432, 7
    %v434 = vsub.s32 1, %v433
    %v435 = vrot.slane %v426, %v434
    %v436 = vlaneseq
    %v437 = vshrl.u32 %v436, 7
    %v438 = vsub.s32 2, %v437
    %v439 = vrot.slane %v426, %v438
    %v440 = vlaneseq
    %v441 = vshrl.u32 %v440, 7
    %v442 = vsub.s32 3, %v441
    %v443 = vrot.slane %v426, %v442
    %v448 = vmul.f32 %v362, %v431
    %v449 = vmul.f32 %v363, %v435
    %v450 = vmul.f32 %v364, %v439
    %v451 = vmul.f32 %v365, %v443
    %v452 = vmul.f32 %v366, %v431
    %v453 = vmul.f32 %v367, %v435
    %v454 = vmul.f32 %v368, %v439
    %v455 = vmul.f32 %v369, %v443
    %v456 = vmul.f32 %v370, %v431
    %v457 = vmul.f32 %v371, %v435
    %v458 = vmul.f32 %v372, %v439
    %v459 = vmul.f32 %v373, %v443
    %v460 = vmul.f32 %v374, %v431
    %v461 = vmul.f32 %v375, %v435
    %v462 = vmul.f32 %v376, %v439
    %v463 = vmul.f32 %v377, %v443
    %v464 = vmul.f32 %v378, %v431
    %v465 = vmul.f32 %v379, %v435
    %v466 = vmul.f32 %v380, %v439
    %v467 = vmul.f32 %v381, %v443
    %v468 = vmul.f32 %v382, %v431
    %v469 = vmul.f32 %v383, %v435
    %v470 = vmul.f32 %v384, %v439
    %v471 = vmul.f32 %v385, %v443
    %v472 = vmul.f32 %v386, %v431
    %v473 = vmul.f32 %v387, %v435
    %v474 = vmul.f32 %v388, %v439
    %v475 = vmul.f32 %v389, %v443
    %v476 = vmul.f32 %v390, %v431
    %v477 = vmul.f32 %v391, %v435
    %v478 = vmul.f32 %v392, %v439
    %v479 = vmul.f32 %v393, %v443
    %v480 = vmul.f32 %v394, %v431
    %v481 = vmul.f32 %v395, %v435
    %v482 = vmul.f32 %v396, %v439
    %v483 = vmul.f32 %v397, %v443
    %v484 = vmul.f32 %v398, %v431
    %v485 = vmul.f32 %v399, %v435
    %v486 = vmul.f32 %v400, %v439
    %v487 = vmul.f32 %v401, %v443
    %v488 = vmul.f32 %v402, %v431
    %v489 = vmul.f32 %v403, %v435
    %v490 = vmul.f32 %v404, %v439
    %v491 = vmul.f32 %v405, %v443
    %v492 = vmul.f32 %v406, %v431
    %v493 = vmul.f32 %v407, %v435
    %v494 = vmul.f32 %v408, %v439
    %v495 = vmul.f32 %v409, %v443
    %v496 = vmul.f32 %v410, %v431
    %v497 = vmul.f32 %v411, %v435
    %v498 = vmul.f32 %v412, %v439
    %v499 = vmul.f32 %v413, %v443
    %v500 = vmul.f32 %v414, %v431
    %v501 = vmul.f32 %v415, %v435
    %v502 = vmul.f32 %v416, %v439
    %v503 = vmul.f32 %v417, %v443
    %v504 = vmul.f32 %v418, %v431
    %v505 = vmul.f32 %v419, %v435
    %v506 = vmul.f32 %v420, %v439
    %v507 = vmul.f32 %v421, %v443
    %v508 = vmul.f32 %v422, %v431
    %v509 = vmul.f32 %v423, %v435
    %v510 = vmul.f32 %v424, %v439
    %v511 = vmul.f32 %v425, %v443
    %v512 = vpack.c.bf16 %v452, %v448
    %v513 = vpack.c.bf16 %v453, %v449
    %v514 = vpack.c.bf16 %v454, %v450
    %v515 = vpack.c.bf16 %v455, %v451
    %v516 = vpack.c.bf16 %v460, %v456
    %v517 = vpack.c.bf16 %v461, %v457
    %v518 = vpack.c.bf16 %v462, %v458
    %v519 = vpack.c.bf16 %v463, %v459
    %v520 = vpack.c.bf16 %v468, %v464
    %v521 = vpack.c.bf16 %v469, %v465
    %v522 = vpack.c.bf16 %v470, %v466
    %v523 = vpack.c.bf16 %v471, %v467
    %v524 = vpack.c.bf16 %v476, %v472
    %v525 = vpack.c.bf16 %v477, %v473
    %v526 = vpack.c.bf16 %v478, %v474
    %v527 = vpack.c.bf16 %v479, %v475
    %v528 = vpack.c.bf16 %v484, %v480
    %v529 = vpack.c.bf16 %v485, %v481
    %v530 = vpack.c.bf16 %v486, %v482
    %v531 = vpack.c.bf16 %v487, %v483
    %v532 = vpack.c.bf16 %v492, %v488
    %v533 = vpack.c.bf16 %v493, %v489
    %v534 = vpack.c.bf16 %v494, %v490
    %v535 = vpack.c.bf16 %v495, %v491
    %v536 = vpack.c.bf16 %v500, %v496
    %v537 = vpack.c.bf16 %v501, %v497
    %v538 = vpack.c.bf16 %v502, %v498
    %v539 = vpack.c.bf16 %v503, %v499
    %v540 = vpack.c.bf16 %v508, %v504
    %v541 = vpack.c.bf16 %v509, %v505
    %v542 = vpack.c.bf16 %v510, %v506
    %v543 = vpack.c.bf16 %v511, %v507
    %v576 = vunpack.c.l.b16 %v512
    %v577 = vunpack.c.l.b16 %v513
    %v578 = vunpack.c.l.b16 %v514
    %v579 = vunpack.c.l.b16 %v515
    %v580 = vunpack.c.h.b16 %v512
    %v581 = vunpack.c.h.b16 %v513
    %v582 = vunpack.c.h.b16 %v514
    %v583 = vunpack.c.h.b16 %v515
    %v584 = vunpack.c.l.b16 %v516
    %v585 = vunpack.c.l.b16 %v517
    %v586 = vunpack.c.l.b16 %v518
    %v587 = vunpack.c.l.b16 %v519
    %v588 = vunpack.c.h.b16 %v516
    %v589 = vunpack.c.h.b16 %v517
    %v590 = vunpack.c.h.b16 %v518
    %v591 = vunpack.c.h.b16 %v519
    %v592 = vunpack.c.l.b16 %v520
    %v593 = vunpack.c.l.b16 %v521
    %v594 = vunpack.c.l.b16 %v522
    %v595 = vunpack.c.l.b16 %v523
    %v596 = vunpack.c.h.b16 %v520
    %v597 = vunpack.c.h.b16 %v521
    %v598 = vunpack.c.h.b16 %v522
    %v599 = vunpack.c.h.b16 %v523
    %v600 = vunpack.c.l.b16 %v524
    %v601 = vunpack.c.l.b16 %v525
    %v602 = vunpack.c.l.b16 %v526
    %v603 = vunpack.c.l.b16 %v527
    %v604 = vunpack.c.h.b16 %v524
    %v605 = vunpack.c.h.b16 %v525
    %v606 = vunpack.c.h.b16 %v526
    %v607 = vunpack.c.h.b16 %v527
    %v608 = vunpack.c.l.b16 %v528
    %v609 = vunpack.c.l.b16 %v529
    %v610 = vunpack.c.l.b16 %v530
    %v611 = vunpack.c.l.b16 %v531
    %v612 = vunpack.c.h.b16 %v528
    %v613 = vunpack.c.h.b16 %v529
    %v614 = vunpack.c.h.b16 %v530
    %v615 = vunpack.c.h.b16 %v531
    %v616 = vunpack.c.l.b16 %v532
    %v617 = vunpack.c.l.b16 %v533
    %v618 = vunpack.c.l.b16 %v534
    %v619 = vunpack.c.l.b16 %v535
    %v620 = vunpack.c.h.b16 %v532
    %v621 = vunpack.c.h.b16 %v533
    %v622 = vunpack.c.h.b16 %v534
    %v623 = vunpack.c.h.b16 %v535
    %v624 = vunpack.c.l.b16 %v536
    %v625 = vunpack.c.l.b16 %v537
    %v626 = vunpack.c.l.b16 %v538
    %v627 = vunpack.c.l.b16 %v539
    %v628 = vunpack.c.h.b16 %v536
    %v629 = vunpack.c.h.b16 %v537
    %v630 = vunpack.c.h.b16 %v538
    %v631 = vunpack.c.h.b16 %v539
    %v632 = vunpack.c.l.b16 %v540
    %v633 = vunpack.c.l.b16 %v541
    %v634 = vunpack.c.l.b16 %v542
    %v635 = vunpack.c.l.b16 %v543
    %v636 = vunpack.c.h.b16 %v540
    %v637 = vunpack.c.h.b16 %v541
    %v638 = vunpack.c.h.b16 %v542
    %v639 = vunpack.c.h.b16 %v543
    %v640 = vpack.c.b16 %v577, %v576
    %v641 = vpack.c.b16 %v579, %v578
    %v642 = vpack.c.b16 %v581, %v580
    %v643 = vpack.c.b16 %v583, %v582
    %v644 = vpack.c.b16 %v585, %v584
    %v645 = vpack.c.b16 %v587, %v586
    %v646 = vpack.c.b16 %v589, %v588
    %v647 = vpack.c.b16 %v591, %v590
    %v648 = vpack.c.b16 %v593, %v592
    %v649 = vpack.c.b16 %v595, %v594
    %v650 = vpack.c.b16 %v597, %v596
    %v651 = vpack.c.b16 %v599, %v598
    %v652 = vpack.c.b16 %v601, %v600
    %v653 = vpack.c.b16 %v603, %v602
    %v654 = vpack.c.b16 %v605, %v604
    %v655 = vpack.c.b16 %v607, %v606
    %v656 = vpack.c.b16 %v609, %v608
    %v657 = vpack.c.b16 %v611, %v610
    %v658 = vpack.c.b16 %v613, %v612
    %v659 = vpack.c.b16 %v615, %v614
    %v660 = vpack.c.b16 %v617, %v616
    %v661 = vpack.c.b16 %v619, %v618
    %v662 = vpack.c.b16 %v621, %v620
    %v663 = vpack.c.b16 %v623, %v622
    %v664 = vpack.c.b16 %v625, %v624
    %v665 = vpack.c.b16 %v627, %v626
    %v666 = vpack.c.b16 %v629, %v628
    %v667 = vpack.c.b16 %v631, %v630
    %v668 = vpack.c.b16 %v633, %v632
    %v669 = vpack.c.b16 %v635, %v634
    %v670 = vpack.c.b16 %v637, %v636
    %v671 = vpack.c.b16 %v639, %v638
    %704 = vst [vmem:[#allocation7] sm:$0xff] %v640
    %705 = vst [vmem:[#allocation7 + $0x8] sm:$0xff] %v641
    %706 = vst [vmem:[#allocation7 + $0x10] sm:$0xff] %v642
    %707 = vst [vmem:[#allocation7 + $0x18] sm:$0xff] %v643
    %708 = vst [vmem:[#allocation7 + $0x20] sm:$0xff] %v644
    %709 = vst [vmem:[#allocation7 + $0x28] sm:$0xff] %v645
    %710 = vst [vmem:[#allocation7 + $0x30] sm:$0xff] %v646
    %711 = vst [vmem:[#allocation7 + $0x38] sm:$0xff] %v647
    %712 = vst [vmem:[#allocation7 + $0x40] sm:$0xff] %v648
    %713 = vst [vmem:[#allocation7 + $0x48] sm:$0xff] %v649
    %714 = vst [vmem:[#allocation7 + $0x50] sm:$0xff] %v650
    %715 = vst [vmem:[#allocation7 + $0x58] sm:$0xff] %v651
    %716 = vst [vmem:[#allocation7 + $0x60] sm:$0xff] %v652
    %717 = vst [vmem:[#allocation7 + $0x68] sm:$0xff] %v653
    %718 = vst [vmem:[#allocation7 + $0x70] sm:$0xff] %v654
    %719 = vst [vmem:[#allocation7 + $0x78] sm:$0xff] %v655
    %720 = vst [vmem:[#allocation7 + $0x80] sm:$0xff] %v656
    %721 = vst [vmem:[#allocation7 + $0x88] sm:$0xff] %v657
    %722 = vst [vmem:[#allocation7 + $0x90] sm:$0xff] %v658
    %723 = vst [vmem:[#allocation7 + $0x98] sm:$0xff] %v659
    %724 = vst [vmem:[#allocation7 + $0xa0] sm:$0xff] %v660
    %725 = vst [vmem:[#allocation7 + $0xa8] sm:$0xff] %v661
    %726 = vst [vmem:[#allocation7 + $0xb0] sm:$0xff] %v662
    %727 = vst [vmem:[#allocation7 + $0xb8] sm:$0xff] %v663
    %728 = vst [vmem:[#allocation7 + $0xc0] sm:$0xff] %v664
    %729 = vst [vmem:[#allocation7 + $0xc8] sm:$0xff] %v665
    %730 = vst [vmem:[#allocation7 + $0xd0] sm:$0xff] %v666
    %731 = vst [vmem:[#allocation7 + $0xd8] sm:$0xff] %v667
    %732 = vst [vmem:[#allocation7 + $0xe0] sm:$0xff] %v668
    %733 = vst [vmem:[#allocation7 + $0xe8] sm:$0xff] %v669
    %734 = vst [vmem:[#allocation7 + $0xf0] sm:$0xff] %v670
    %735 = vst [vmem:[#allocation7 + $0xf8] sm:$0xff] %v671
    // Predicated region
    $region18: #{tpu_custom_call.1} parent=1 // pred_check
      _
    $region19: #{tpu_custom_call.1} parent=1 // pred_check_branch
      %737 = sbr.rel (0) target = $region21
    $region20: #{tpu_custom_call.1} parent=1 // pred_region
      %s739 = ssub.s32 4096, 4096
      %740 = vsyncadd [#allocation4], %s739
      %s741 = sshll.u32 [#allocation7], 4
      %s742 = int_to_ptr.vmem [resolvable:$true] %s741
      %747 = dma.vmem_to_hbm [thread:$0]  %s742, 4096, %s2, [#allocation4], 256, 256, 16
    $region21: #{tpu_custom_call.1} parent=1 // pred_fallthru
      _
    // Predicated region
    $region22: #{tpu_custom_call.1} parent=1 // pred_check
      _
    $region23: #{tpu_custom_call.1} parent=1 // pred_check_branch
      %749 = sbr.rel (0) target = $region25
    $region24: #{tpu_custom_call.1} parent=1 // pred_region
      %s751 = ssub.s32 4096, 4096
      %752 = vsyncadd [#allocation9], %s751
      %s753 = sshll.u32 [#allocation8], 4
      %s754 = int_to_ptr.vmem [resolvable:$true] %s753
      %759 = dma.vmem_to_hbm [thread:$0]  %s754, 4096, %s3, [#allocation9], 256, 256, 16
    $region25: #{tpu_custom_call.1} parent=1 // pred_fallthru
      _
    // Predicated region
    $region26: #{tpu_custom_call.1} parent=1 // pred_check
      _
    $region27: #{tpu_custom_call.1} parent=1 // pred_check_branch
      %761 = sbr.rel (0) target = $region29
    $region28: #{tpu_custom_call.1} parent=1 // pred_region
      %762 = dma.done [#allocation4], 4096
    $region29: #{tpu_custom_call.1} parent=1 // pred_fallthru
      _
    // Predicated region
    $region30: #{tpu_custom_call.1} parent=1 // pred_check
      _
    $region31: #{tpu_custom_call.1} parent=1 // pred_check_branch
      %764 = sbr.rel (0) target = $region33
    $region32: #{tpu_custom_call.1} parent=1 // pred_region
      %765 = dma.done [#allocation9], 4096
    $region33: #{tpu_custom_call.1} parent=1 // pred_fallthru
      _
    %766 = vsyncpa [#allocation3], 1
    %767 = vsyncpa [#allocation6], 1
    %768 = vsyncpa [#allocation4], 1
    %769 = vsyncpa [#allocation9], 1

</llo_original>
